<compile_context>
chip_gen: v6e
topology: v6e:2x2x1
jax: 0.10.0
libtpu: 0.0.40
codegen_flags: <defaults>
</compile_context>

<pallas_src>
import jax
import jax.numpy as jnp
from jax.experimental import pallas as pl
from jax.experimental.pallas import tpu as pltpu


def basic_block_kernel(xcol_ref, w1_ref, w2_ref, b1_ref, b2_ref, mask_ref,
                       out_ref):
    # xcol_ref: (3*Cp, TL)  im2col input rows [x(l-1); x(l); x(l+1)], batch
    #                       folded into lanes (TL = NB * Lp, Lp multiple of 128)
    # w1_ref  : (Op, 3*Cp)  conv1 weight with BN1 scale folded, im2col layout
    # w2_ref  : (Op, 3*Op)  conv2 weight with BN2 scale folded, im2col layout
    # b1_ref  : (Op, 1)     folded BN1 bias
    # b2_ref  : (Op, 1)     folded BN2 bias
    # mask_ref: (1, TL)     1.0 where lane is a valid position (< L), else 0.0
    # out_ref : (Op, TL)
    xcol = xcol_ref[...]
    cp = w1_ref.shape[1] // 3
    tl = xcol.shape[1]

    # ---- conv1 (+ folded bn1 scale) as one MXU matmul, then bias + relu ----
    h = jnp.dot(w1_ref[...], xcol, preferred_element_type=jnp.float32)
    h = jnp.maximum(h + b1_ref[...], 0.0)
    # Zero the per-element length-padding lanes so the rolls below cannot
    # leak values across element boundaries (this is conv2's zero padding).
    h = h * mask_ref[...]

    # ---- conv2 im2col: shifted views via XLU roll, stacked on sublanes ----
    h_left = pltpu.roll(h, shift=1, axis=1)        # h[l-1] (zero at l == 0)
    h_right = pltpu.roll(h, shift=tl - 1, axis=1)  # h[l+1] (zero at l == L-1)
    hcol = jnp.concatenate([h_left, h, h_right], axis=0)     # (3*Op, TL)

    out = jnp.dot(w2_ref[...], hcol, preferred_element_type=jnp.float32)
    out = out + b2_ref[...]
    # Residual: the center-tap rows of the im2col block are exactly x.
    out = out + xcol[cp:2 * cp, :]
    out_ref[...] = jnp.maximum(out, 0.0).astype(out_ref.dtype)


def _round_up(v, m):
    return ((v + m - 1) // m) * m


def basic_block_forward(x, w1, w2, g1, be1, m1, v1, g2, be2, m2, v2,
                        eps=1e-5):
    """x: (N, C, L) float32.  Returns (N, O, L) with O == C (no downsample)."""
    N, C, L = x.shape
    O = w1.shape[0]
    assert O == C, "no downsample path: inplanes must equal planes"

    Cp = _round_up(C, 8)
    Op = _round_up(O, 8)
    # Lp >= L+1 guarantees at least one zero lane between batch elements,
    # which supplies conv2's halo zeros across the flattened lane layout.
    Lp = _round_up(L + 1, 128)

    x = x.astype(jnp.float32)

    # ---- fold BN (inference) scale into weights, keep biases separate ----
    inv1 = g1 / jnp.sqrt(v1 + eps)
    inv2 = g2 / jnp.sqrt(v2 + eps)
    w1f = (w1 * inv1[:, None, None]).astype(jnp.float32)      # (O, C, 3)
    w2f = (w2 * inv2[:, None, None]).astype(jnp.float32)      # (O, O, 3)
    b1 = (be1 - m1 * inv1).astype(jnp.float32)
    b2 = (be2 - m2 * inv2).astype(jnp.float32)

    # ---- im2col weights (lane-dense contraction dim), channel-padded ----
    W1 = jnp.zeros((Op, 3 * Cp), jnp.float32)
    W2 = jnp.zeros((Op, 3 * Op), jnp.float32)
    for k in range(3):
        W1 = W1.at[:O, k * Cp:k * Cp + C].set(w1f[:, :, k])
        W2 = W2.at[:O, k * Op:k * Op + O].set(w2f[:, :, k])
    B1 = jnp.zeros((Op, 1), jnp.float32).at[:O, 0].set(b1)
    B2 = jnp.zeros((Op, 1), jnp.float32).at[:O, 0].set(b2)

    # ---- im2col input: three shifted views, batch folded into lanes ----
    # center tap x[l]: padded to (N, Cp, Lp)
    xc = jnp.pad(x, ((0, 0), (0, Cp - C), (0, Lp - L)))
    # left tap x[l-1]: shift right by one, zero at l == 0
    xl = jnp.pad(x, ((0, 0), (0, Cp - C), (1, Lp - L - 1)))
    # right tap x[l+1]: shift left by one, zero at l == L-1
    xr = jnp.pad(x[:, :, 1:], ((0, 0), (0, Cp - C), (0, Lp - L + 1)))
    xcol = jnp.concatenate([xl, xc, xr], axis=1)              # (N, 3Cp, Lp)
    xcol = xcol.transpose(1, 0, 2).reshape(3 * Cp, N * Lp)    # (3Cp, N*Lp)

    # validity mask over lanes (1 where position-within-element < L)
    mask = (jnp.arange(Lp) < L).astype(jnp.float32)
    mask = jnp.tile(mask, (N,)).reshape(1, N * Lp)

    # ---- lane tiling: whole batch elements per grid step ----------------
    # Target ~1024 lanes per tile (amortize per-step overhead) but keep at
    # least two grid steps when N >= 2 so dual-TC chips both get work.
    target_lanes = 1024
    NB = max(1, min(N, target_lanes // Lp))
    if N >= 2:
        NB = min(NB, max(1, N // 2))
    while N % NB != 0:
        NB -= 1
    TL = NB * Lp
    grid = (N // NB,)

    out_flat = pl.pallas_call(
        basic_block_kernel,
        out_shape=jax.ShapeDtypeStruct((Op, N * Lp), jnp.float32),
        grid_spec=pltpu.PrefetchScalarGridSpec(
            num_scalar_prefetch=0,
            grid=grid,
            in_specs=[
                pl.BlockSpec((3 * Cp, TL), lambda i: (0, i)),
                pl.BlockSpec((Op, 3 * Cp), lambda i: (0, 0)),
                pl.BlockSpec((Op, 3 * Op), lambda i: (0, 0)),
                pl.BlockSpec((Op, 1), lambda i: (0, 0)),
                pl.BlockSpec((Op, 1), lambda i: (0, 0)),
                pl.BlockSpec((1, TL), lambda i: (0, i)),
            ],
            out_specs=pl.BlockSpec((Op, TL), lambda i: (0, i)),
        ),
        compiler_params=pltpu.CompilerParams(
            dimension_semantics=("parallel",)),
    )(xcol, W1, W2, B1, B2, mask)

    out = out_flat.reshape(Op, N, Lp).transpose(1, 0, 2)      # (N, Op, Lp)
    return out[:, :O, :L]


def _reference(x, w1, w2, g1, be1, m1, v1, g2, be2, m2, v2, eps=1e-5):
    """Plain-JAX reference mirroring the PyTorch forward (BN in eval mode)."""
    def conv3(xx, w):
        N, C, L = xx.shape
        xpad = jnp.pad(xx, ((0, 0), (0, 0), (1, 1)))
        out = jnp.zeros((N, w.shape[0], L), jnp.float32)
        for k in range(3):
            out = out + jnp.einsum('oc,ncl->nol', w[:, :, k],
                                   xpad[:, :, k:k + L])
        return out

    def bn(xx, g, b, m, v):
        inv = g / jnp.sqrt(v + eps)
        return xx * inv[None, :, None] + (b - m * inv)[None, :, None]

    h = jax.nn.relu(bn(conv3(x, w1), g1, be1, m1, v1))
    o = bn(conv3(h, w2), g2, be2, m2, v2) + x
    return jax.nn.relu(o)


def _make_inputs(key, N, C, L):
    O = C
    ks = jax.random.split(key, 11)
    x = jax.random.normal(ks[0], (N, C, L), jnp.float32)
    w1 = jax.random.normal(ks[1], (O, C, 3), jnp.float32) * 0.2
    w2 = jax.random.normal(ks[2], (O, O, 3), jnp.float32) * 0.2
    g1 = 1.0 + 0.1 * jax.random.normal(ks[3], (O,), jnp.float32)
    be1 = 0.1 * jax.random.normal(ks[4], (O,), jnp.float32)
    m1 = 0.1 * jax.random.normal(ks[5], (O,), jnp.float32)
    v1 = 0.5 + jnp.abs(jax.random.normal(ks[6], (O,), jnp.float32))
    g2 = 1.0 + 0.1 * jax.random.normal(ks[7], (O,), jnp.float32)
    be2 = 0.1 * jax.random.normal(ks[8], (O,), jnp.float32)
    m2 = 0.1 * jax.random.normal(ks[9], (O,), jnp.float32)
    v2 = 0.5 + jnp.abs(jax.random.normal(ks[10], (O,), jnp.float32))
    return (x, w1, w2, g1, be1, m1, v1, g2, be2, m2, v2)


if __name__ == "__main__":
    key = jax.random.PRNGKey(0)

    # Primary small test: inplanes = planes = 4, stride = 1, batch = 2, L = 16.
    args = _make_inputs(key, N=2, C=4, L=16)
    out = jax.block_until_ready(basic_block_forward(*args))
    ref = _reference(*args)
    assert out.shape == ref.shape
    assert jnp.allclose(out, ref, atol=1e-4, rtol=1e-4), "mismatch vs reference"

    # Secondary check: odd L, channel padding, multi-step grid.
    args2 = _make_inputs(jax.random.PRNGKey(1), N=3, C=6, L=100)
    out2 = jax.block_until_ready(basic_block_forward(*args2))
    ref2 = _reference(*args2)
    assert jnp.allclose(out2, ref2, atol=1e-4, rtol=1e-4), "mismatch (cfg 2)"

    print("KERNEL_OK")
</pallas_src>

<mosaic_0001>
module attributes {stable_mosaic.version = 11 : i64} {
  func.func @basic_block_kernel(%arg0: i32, %arg1: memref<24x128xf32, #tpu.memory_space<vmem>>, %arg2: memref<8x24xf32, #tpu.memory_space<vmem>>, %arg3: memref<8x24xf32, #tpu.memory_space<vmem>>, %arg4: memref<8x1xf32, #tpu.memory_space<vmem>>, %arg5: memref<8x1xf32, #tpu.memory_space<vmem>>, %arg6: memref<1x128xf32, #tpu.memory_space<vmem>>, %arg7: memref<8x128xf32, #tpu.memory_space<vmem>>) attributes {dimension_semantics = [#tpu.dimension_semantics<parallel>], iteration_bounds = array<i64: 2>, scalar_prefetch = 0 : i64, scratch_operands = 0 : i64, tpu.core_type = #tpu.core_type<tc>, window_params = [{transform_indices = @transform_0, window_bounds = array<i64: 24, 128>}, {pipeline_mode = #tpu.pipeline_mode<synchronous>, transform_indices = @transform_1, window_bounds = array<i64: 8, 24>}, {pipeline_mode = #tpu.pipeline_mode<synchronous>, transform_indices = @transform_2, window_bounds = array<i64: 8, 24>}, {pipeline_mode = #tpu.pipeline_mode<synchronous>, transform_indices = @transform_3, window_bounds = array<i64: 8, 1>}, {pipeline_mode = #tpu.pipeline_mode<synchronous>, transform_indices = @transform_4, window_bounds = array<i64: 8, 1>}, {transform_indices = @transform_5, window_bounds = array<i64: 1, 128>}, {transform_indices = @transform_6, window_bounds = array<i64: 8, 128>}]} {
    %c0 = arith.constant 0 : index
    %c0_0 = arith.constant 0 : index
    %0 = vector.load %arg1[%c0, %c0_0] : memref<24x128xf32, #tpu.memory_space<vmem>>, vector<24x128xf32>
    %c0_1 = arith.constant 0 : index
    %c0_2 = arith.constant 0 : index
    %1 = vector.load %arg2[%c0_1, %c0_2] : memref<8x24xf32, #tpu.memory_space<vmem>>, vector<8x24xf32>
    %cst = arith.constant dense<0.000000e+00> : vector<8x128xf32>
    %2 = tpu.matmul %1, %0, %cst {dimension_numbers = #tpu.dot_dimension_numbers<[1], [0], [0], [1], [0, 0, 1, 1], [], []>} : vector<8x24xf32>, vector<24x128xf32>, vector<8x128xf32> -> vector<8x128xf32>
    %c0_3 = arith.constant 0 : index
    %c0_4 = arith.constant 0 : index
    %3 = vector.load %arg4[%c0_3, %c0_4] : memref<8x1xf32, #tpu.memory_space<vmem>>, vector<8x1xf32>
    %4 = vector.broadcast %3 : vector<8x1xf32> to vector<8x128xf32>
    %5 = arith.addf %2, %4 : vector<8x128xf32>
    %cst_5 = arith.constant 0.000000e+00 : f32
    %6 = vector.broadcast %cst_5 : f32 to vector<8x128xf32>
    %7 = arith.maximumf %5, %6 : vector<8x128xf32>
    %c0_6 = arith.constant 0 : index
    %c0_7 = arith.constant 0 : index
    %8 = vector.load %arg6[%c0_6, %c0_7] : memref<1x128xf32, #tpu.memory_space<vmem>>, vector<1x128xf32>
    %9 = vector.broadcast %8 : vector<1x128xf32> to vector<8x128xf32>
    %10 = arith.mulf %7, %9 : vector<8x128xf32>
    %c1_i32 = arith.constant 1 : i32
    %11 = tpu.dynamic_rotate %10 by %c1_i32 dim 1 : vector<8x128xf32>, i32 -> vector<8x128xf32>
    %c127_i32 = arith.constant 127 : i32
    %12 = tpu.dynamic_rotate %10 by %c127_i32 dim 1 : vector<8x128xf32>, i32 -> vector<8x128xf32>
    %13 = tpu.concatenate %11, %10, %12 in 0 : vector<8x128xf32>, vector<8x128xf32>, vector<8x128xf32> -> vector<24x128xf32>
    %c0_8 = arith.constant 0 : index
    %c0_9 = arith.constant 0 : index
    %14 = vector.load %arg3[%c0_8, %c0_9] : memref<8x24xf32, #tpu.memory_space<vmem>>, vector<8x24xf32>
    %cst_10 = arith.constant dense<0.000000e+00> : vector<8x128xf32>
    %15 = tpu.matmul %14, %13, %cst_10 {dimension_numbers = #tpu.dot_dimension_numbers<[1], [0], [0], [1], [0, 0, 1, 1], [], []>} : vector<8x24xf32>, vector<24x128xf32>, vector<8x128xf32> -> vector<8x128xf32>
    %c0_11 = arith.constant 0 : index
    %c0_12 = arith.constant 0 : index
    %16 = vector.load %arg5[%c0_11, %c0_12] : memref<8x1xf32, #tpu.memory_space<vmem>>, vector<8x1xf32>
    %17 = vector.broadcast %16 : vector<8x1xf32> to vector<8x128xf32>
    %18 = arith.addf %15, %17 : vector<8x128xf32>
    %19 = vector.extract_strided_slice %0 {offsets = [8, 0], sizes = [8, 128], strides = [1, 1]} : vector<24x128xf32> to vector<8x128xf32>
    %20 = arith.addf %18, %19 : vector<8x128xf32>
    %cst_13 = arith.constant 0.000000e+00 : f32
    %21 = vector.broadcast %cst_13 : f32 to vector<8x128xf32>
    %22 = arith.maximumf %20, %21 : vector<8x128xf32>
    %c0_14 = arith.constant 0 : index
    %c0_15 = arith.constant 0 : index
    %23 = vector.load %arg7[%c0_14, %c0_15] : memref<8x128xf32, #tpu.memory_space<vmem>>, vector<8x128xf32>
    tpu.vector_store %arg7[%c0_14, %c0_15], %22 {strides = array<i32>} : memref<8x128xf32, #tpu.memory_space<vmem>>, vector<8x128xf32>,
    return
  }
  func.func @transform_0(%arg0: i32) -> (i32, i32) {
    %c0_i32 = arith.constant 0 : i32
    %c0_i32_0 = arith.constant 0 : i32
    return %c0_i32, %arg0 : i32, i32
  }
  func.func @transform_1(%arg0: i32) -> (i32, i32) {
    %c0_i32 = arith.constant 0 : i32
    %c0_i32_0 = arith.constant 0 : i32
    %c0_i32_1 = arith.constant 0 : i32
    return %c0_i32, %c0_i32_0 : i32, i32
  }
  func.func @transform_2(%arg0: i32) -> (i32, i32) {
    %c0_i32 = arith.constant 0 : i32
    %c0_i32_0 = arith.constant 0 : i32
    %c0_i32_1 = arith.constant 0 : i32
    return %c0_i32, %c0_i32_0 : i32, i32
  }
  func.func @transform_3(%arg0: i32) -> (i32, i32) {
    %c0_i32 = arith.constant 0 : i32
    %c0_i32_0 = arith.constant 0 : i32
    %c0_i32_1 = arith.constant 0 : i32
    return %c0_i32, %c0_i32_0 : i32, i32
  }
  func.func @transform_4(%arg0: i32) -> (i32, i32) {
    %c0_i32 = arith.constant 0 : i32
    %c0_i32_0 = arith.constant 0 : i32
    %c0_i32_1 = arith.constant 0 : i32
    return %c0_i32, %c0_i32_0 : i32, i32
  }
  func.func @transform_5(%arg0: i32) -> (i32, i32) {
    %c0_i32 = arith.constant 0 : i32
    %c0_i32_0 = arith.constant 0 : i32
    return %c0_i32, %arg0 : i32, i32
  }
  func.func @transform_6(%arg0: i32) -> (i32, i32) {
    %c0_i32 = arith.constant 0 : i32
    %c0_i32_0 = arith.constant 0 : i32
    return %c0_i32, %arg0 : i32, i32
  }
}

</mosaic_0001>

<llo_original>
// kernel: tpu_custom_call.1
$region0: #{tpu_custom_call.1}
  #allocation0 [shape = 'u32[]', space=smem, size = 0x4, offset = 0x4, fixed_abs, tag = 'smem constant byte address 0x4 - core index']
  #allocation1 [shape = 'u32[144,128]{1,0:T(1,128)}', space=vmem, size = 0x12000, scoped, tag = 'internal scratch']
  %s0 = inlined_call_operand.hbm [shape: f32[24,256], index: 0, kind: input, shape index: {}]
  %s1 = inlined_call_operand.vmem [shape: f32[8,24], index: 1, kind: input, shape index: {}]
  %s2 = inlined_call_operand.vmem [shape: f32[8,24], index: 2, kind: input, shape index: {}]
  %s3 = inlined_call_operand.vmem [shape: f32[8,1], index: 3, kind: input, shape index: {}]
  %s4 = inlined_call_operand.vmem [shape: f32[8,1], index: 4, kind: input, shape index: {}]
  %s5 = inlined_call_operand.vmem [shape: f32[1,256], index: 5, kind: input, shape index: {}]
  %s6 = inlined_call_operand.hbm [shape: f32[8,256], index: 6, kind: output, shape index: {}]
  %s7 = sld [smem:[#allocation0]]
  $region61: #{tpu_custom_call.1} parent=0
    _
  %s9 = ssub.s32 1, %s7
  %s10 = scalar_select 0, %s9, %s7
  $region1: #{tpu_custom_call.1} parent=0
    #allocation2 [shape = 'u8[24576]{0}', space=vmem, size = 0x6000, scoped, tag = 'input window, operand 0']
    #allocation3 [shape = 's32[2]{0}', space=sflag, size = 0x8, scoped, tag = 'scoped memory for tpu_custom_call.1']
    #allocation4 [shape = 's32[2]{0}', space=sflag, size = 0x8, scoped, tag = 'scoped memory for tpu_custom_call.1']
    #allocation5 [shape = 'u8[8192]{0}', space=vmem, size = 0x2000, scoped, tag = 'output window, operand 0']
    %11 = vsyncpa [#allocation3], 0
    %s12 = scalar_lea.sflag [#allocation3], 1
    %13 = vsyncpa %s12, 0
    %14 = vsyncpa [#allocation4], 0
    %s15 = scalar_lea.sflag [#allocation4], 1
    %16 = vsyncpa %s15, 0
    loop: start=0, step=1, limit=4
    $region2: #{tpu_custom_call.1} parent=1 // loop_pre_header
      _
    $region3: #{tpu_custom_call.1} parent=1 // loop_header
      %s18 = sphi 0, %s22
      %p19 = scmp.ge.s32.totalorder %s18, 4
      %s28 = sphi 0, %s30
      %s31 = sphi 0, %s28
      %s32 = sphi 0, %s31
      %s48 = sphi 0, %s32
      %s52 = sphi 0, %s52
      %s54 = sphi 0, %s52
      %s55 = sphi 0, %s54
      %s69 = sphi 0, %s55
      %s73 = sphi 0, %s73
      %s75 = sphi 0, %s73
      %s76 = sphi 0, %s75
      %s90 = sphi 0, %s76
      %s94 = sphi 0, %s94
      %s96 = sphi 0, %s94
      %s97 = sphi 0, %s96
      %s111 = sphi 0, %s97
      %s115 = sphi 0, %s115
      %s117 = sphi 0, %s115
      %s118 = sphi 0, %s117
      %s132 = sphi 0, %s118
      %s138 = sphi 0, %s140
      %s141 = sphi 0, %s138
      %s142 = sphi 0, %s141
      %s158 = sphi 0, %s142
      %s164 = sphi 0, %s166
      %s167 = sphi 0, %s164
      %s168 = sphi 0, %s167
      %s184 = sphi 0, %s168
    $region4: #{tpu_custom_call.1} parent=1 // loop_header_branch
      %21 = sbr.rel (%p19) target = $region8
    $region5: #{tpu_custom_call.1} parent=1 // loop_body
      %s23 = ssub.s32 %s18, 1
      %s24 = ssub.s32 %s18, 2
      %s25 = sadd.s32 %s18, 1
      %s26 = ssub.s32 %s18, %s25
      %p27 = scmp.eq.s32.totalorder %s26, 0
      %s29 = sadd.s32 %s28, 1
      %s30 = scalar_select %p27, %s28, %s29
      %p33 = pneg %p27
      %p34 = scmp.eq.s32.totalorder %s18, 1
      %p35 = por %p33, %p34
      %p36 = scmp.ne.s32.totalorder %s28, %s31
      %p37 = scmp.eq.s32.totalorder %s18, 0
      %p38 = por %p36, %p37
      %p39 = scmp.ne.s32.totalorder %s28, %s31
      %p40 = scmp.eq.s32.totalorder %s23, 1
      %p41 = por %p39, %p40
      %p42 = scmp.ne.s32.totalorder %s31, %s32
      %p43 = scmp.eq.s32.totalorder %s23, 0
      %p44 = por %p42, %p43
      %p45 = scmp.ne.s32.totalorder %s31, %s32
      %p46 = scmp.eq.s32.totalorder %s24, 1
      %p47 = por %p45, %p46
      %p49 = scmp.ne.s32.totalorder %s32, %s48
      %p50 = scmp.eq.s32.totalorder %s24, 0
      %p51 = por %p49, %p50
      %s53 = sadd.s32 %s52, 1
      %p56 = scmp.eq.s32.totalorder %s18, 1
      %p57 = scmp.ne.s32.totalorder %s52, %s54
      %p58 = scmp.eq.s32.totalorder %s18, 0
      %p59 = por %p57, %p58
      %p60 = scmp.ne.s32.totalorder %s52, %s54
      %p61 = scmp.eq.s32.totalorder %s23, 1
      %p62 = por %p60, %p61
      %p63 = scmp.ne.s32.totalorder %s54, %s55
      %p64 = scmp.eq.s32.totalorder %s23, 0
      %p65 = por %p63, %p64
      %p66 = scmp.ne.s32.totalorder %s54, %s55
      %p67 = scmp.eq.s32.totalorder %s24, 1
      %p68 = por %p66, %p67
      %p70 = scmp.ne.s32.totalorder %s55, %s69
      %p71 = scmp.eq.s32.totalorder %s24, 0
      %p72 = por %p70, %p71
      %s74 = sadd.s32 %s73, 1
      %p77 = scmp.eq.s32.totalorder %s18, 1
      %p78 = scmp.ne.s32.totalorder %s73, %s75
      %p79 = scmp.eq.s32.totalorder %s18, 0
      %p80 = por %p78, %p79
      %p81 = scmp.ne.s32.totalorder %s73, %s75
      %p82 = scmp.eq.s32.totalorder %s23, 1
      %p83 = por %p81, %p82
      %p84 = scmp.ne.s32.totalorder %s75, %s76
      %p85 = scmp.eq.s32.totalorder %s23, 0
      %p86 = por %p84, %p85
      %p87 = scmp.ne.s32.totalorder %s75, %s76
      %p88 = scmp.eq.s32.totalorder %s24, 1
      %p89 = por %p87, %p88
      %p91 = scmp.ne.s32.totalorder %s76, %s90
      %p92 = scmp.eq.s32.totalorder %s24, 0
      %p93 = por %p91, %p92
      %s95 = sadd.s32 %s94, 1
      %p98 = scmp.eq.s32.totalorder %s18, 1
      %p99 = scmp.ne.s32.totalorder %s94, %s96
      %p100 = scmp.eq.s32.totalorder %s18, 0
      %p101 = por %p99, %p100
      %p102 = scmp.ne.s32.totalorder %s94, %s96
      %p103 = scmp.eq.s32.totalorder %s23, 1
      %p104 = por %p102, %p103
      %p105 = scmp.ne.s32.totalorder %s96, %s97
      %p106 = scmp.eq.s32.totalorder %s23, 0
      %p107 = por %p105, %p106
      %p108 = scmp.ne.s32.totalorder %s96, %s97
      %p109 = scmp.eq.s32.totalorder %s24, 1
      %p110 = por %p108, %p109
      %p112 = scmp.ne.s32.totalorder %s97, %s111
      %p113 = scmp.eq.s32.totalorder %s24, 0
      %p114 = por %p112, %p113
      %s116 = sadd.s32 %s115, 1
      %p119 = scmp.eq.s32.totalorder %s18, 1
      %p120 = scmp.ne.s32.totalorder %s115, %s117
      %p121 = scmp.eq.s32.totalorder %s18, 0
      %p122 = por %p120, %p121
      %p123 = scmp.ne.s32.totalorder %s115, %s117
      %p124 = scmp.eq.s32.totalorder %s23, 1
      %p125 = por %p123, %p124
      %p126 = scmp.ne.s32.totalorder %s117, %s118
      %p127 = scmp.eq.s32.totalorder %s23, 0
      %p128 = por %p126, %p127
      %p129 = scmp.ne.s32.totalorder %s117, %s118
      %p130 = scmp.eq.s32.totalorder %s24, 1
      %p131 = por %p129, %p130
      %p133 = scmp.ne.s32.totalorder %s118, %s132
      %p134 = scmp.eq.s32.totalorder %s24, 0
      %p135 = por %p133, %p134
      %s136 = ssub.s32 %s18, %s25
      %p137 = scmp.eq.s32.totalorder %s136, 0
      %s139 = sadd.s32 %s138, 1
      %s140 = scalar_select %p137, %s138, %s139
      %p143 = pneg %p137
      %p144 = scmp.eq.s32.totalorder %s18, 1
      %p145 = por %p143, %p144
      %p146 = scmp.ne.s32.totalorder %s138, %s141
      %p147 = scmp.eq.s32.totalorder %s18, 0
      %p148 = por %p146, %p147
      %p149 = scmp.ne.s32.totalorder %s138, %s141
      %p150 = scmp.eq.s32.totalorder %s23, 1
      %p151 = por %p149, %p150
      %p152 = scmp.ne.s32.totalorder %s141, %s142
      %p153 = scmp.eq.s32.totalorder %s23, 0
      %p154 = por %p152, %p153
      %p155 = scmp.ne.s32.totalorder %s141, %s142
      %p156 = scmp.eq.s32.totalorder %s24, 1
      %p157 = por %p155, %p156
      %p159 = scmp.ne.s32.totalorder %s142, %s158
      %p160 = scmp.eq.s32.totalorder %s24, 0
      %p161 = por %p159, %p160
      %s162 = ssub.s32 %s18, %s25
      %p163 = scmp.eq.s32.totalorder %s162, 0
      %s165 = sadd.s32 %s164, 1
      %s166 = scalar_select %p163, %s164, %s165
      %p169 = pneg %p163
      %p170 = scmp.eq.s32.totalorder %s18, 1
      %p171 = por %p169, %p170
      %p172 = scmp.ne.s32.totalorder %s164, %s167
      %p173 = scmp.eq.s32.totalorder %s18, 0
      %p174 = por %p172, %p173
      %p175 = scmp.ne.s32.totalorder %s164, %s167
      %p176 = scmp.eq.s32.totalorder %s23, 1
      %p177 = por %p175, %p176
      %p178 = scmp.ne.s32.totalorder %s167, %s168
      %p179 = scmp.eq.s32.totalorder %s23, 0
      %p180 = por %p178, %p179
      %p181 = scmp.ne.s32.totalorder %s167, %s168
      %p182 = scmp.eq.s32.totalorder %s24, 1
      %p183 = por %p181, %p182
      %p185 = scmp.ne.s32.totalorder %s168, %s184
      %p186 = scmp.eq.s32.totalorder %s24, 0
      %p187 = por %p185, %p186
      %p188 = scmp.le.s32.totalorder 1, %s18
      %p189 = scmp.lt.s32.totalorder %s18, 3
      %p190 = pnand %p188, %p189
      %p191 = pneg %p190
      // Predicated region
      $region9: #{tpu_custom_call.1} parent=5 // pred_check
        _
      $region10: #{tpu_custom_call.1} parent=5 // pred_check_branch
        %193 = sbr.rel (%p190) target = $region12
      $region11: #{tpu_custom_call.1} parent=5 // pred_region
        %s194 = ssub.s32 %s18, 1
        // Predicated region
        $region13: #{tpu_custom_call.1} parent=11 // pred_check
          %p195 = pneg %p65
        $region14: #{tpu_custom_call.1} parent=11 // pred_check_branch
          %197 = sbr.rel (%p195) target = $region16
        $region15: #{tpu_custom_call.1} parent=11 // pred_region
          _
        $region16: #{tpu_custom_call.1} parent=11 // pred_fallthru
          _
        // Predicated region
        $region17: #{tpu_custom_call.1} parent=11 // pred_check
          %p198 = pneg %p86
        $region18: #{tpu_custom_call.1} parent=11 // pred_check_branch
          %200 = sbr.rel (%p198) target = $region20
        $region19: #{tpu_custom_call.1} parent=11 // pred_region
          _
        $region20: #{tpu_custom_call.1} parent=11 // pred_fallthru
          _
        // Predicated region
        $region21: #{tpu_custom_call.1} parent=11 // pred_check
          %p201 = pneg %p107
        $region22: #{tpu_custom_call.1} parent=11 // pred_check_branch
          %203 = sbr.rel (%p201) target = $region24
        $region23: #{tpu_custom_call.1} parent=11 // pred_region
          _
        $region24: #{tpu_custom_call.1} parent=11 // pred_fallthru
          _
        // Predicated region
        $region25: #{tpu_custom_call.1} parent=11 // pred_check
          %p204 = pneg %p128
        $region26: #{tpu_custom_call.1} parent=11 // pred_check_branch
          %206 = sbr.rel (%p204) target = $region28
        $region27: #{tpu_custom_call.1} parent=11 // pred_region
          _
        $region28: #{tpu_custom_call.1} parent=11 // pred_fallthru
          _
      $region12: #{tpu_custom_call.1} parent=5 // pred_fallthru
        _
      %p207 = scmp.lt.s32.totalorder %s18, 2
      // Predicated region
      $region29: #{tpu_custom_call.1} parent=5 // pred_check
        %p208 = pneg %p207
      $region30: #{tpu_custom_call.1} parent=5 // pred_check_branch
        %210 = sbr.rel (%p208) target = $region32
      $region31: #{tpu_custom_call.1} parent=5 // pred_region
        // Predicated region
        $region33: #{tpu_custom_call.1} parent=31 // pred_check
          %p211 = pneg %p38
        $region34: #{tpu_custom_call.1} parent=31 // pred_check_branch
          %213 = sbr.rel (%p211) target = $region36
        $region35: #{tpu_custom_call.1} parent=31 // pred_region
          %s214 = sand.u32 %s28, 1
          %s215 = scalar_lea.sflag [#allocation3], %s214
          %s216 = sand.u32 %s28, 1
          %s217 = smul.addr %s216, 24
          %s218 = scalar_lea.vmem [#allocation2], %s217
          %s220 = ssub.s32 384, 384
          %221 = vsyncadd %s215, %s220
          %s222 = smul.addr %s18, 128
          %s223 = scalar_lea.hbm %s0, %s222
          %s224 = sshll.u32 %s218, 4
          %s225 = int_to_ptr.vmem [resolvable:$true] %s224
          %230 = dma.hbm_to_vmem [thread:$0]  %s223, 384, %s225, %s215, 256, 128, 8
        $region36: #{tpu_custom_call.1} parent=31 // pred_fallthru
          _
        // Predicated region
        $region37: #{tpu_custom_call.1} parent=31 // pred_check
          %p231 = pneg %p148
        $region38: #{tpu_custom_call.1} parent=31 // pred_check_branch
          %233 = sbr.rel (%p231) target = $region40
        $region39: #{tpu_custom_call.1} parent=31 // pred_region
          %p234 = scmp.lt.s32.totalorder %s18, 1
          %s235 = scalar_select %p234, %s18, 1
          %s236 = scalar_lea.vmem %s5, %s235
        $region40: #{tpu_custom_call.1} parent=31 // pred_fallthru
          _
      $region32: #{tpu_custom_call.1} parent=5 // pred_fallthru
        _
      %p237 = scmp.le.s32.totalorder 1, %s18
      %p238 = scmp.lt.s32.totalorder %s18, 3
      %p239 = pnand %p237, %p238
      %p240 = pneg %p239
      // Predicated region
      $region41: #{tpu_custom_call.1} parent=5 // pred_check
        _
      $region42: #{tpu_custom_call.1} parent=5 // pred_check_branch
        %242 = sbr.rel (%p239) target = $region44
      $region43: #{tpu_custom_call.1} parent=5 // pred_region
        %s243 = ssub.s32 %s18, 1
        %s244 = sand.u32 %s31, 1
        %s245 = scalar_lea.sflag [#allocation3], %s244
        %s246 = sand.u32 %s31, 1
        %s247 = smul.addr %s246, 24
        %s248 = scalar_lea.vmem [#allocation2], %s247
        // Predicated region
        $region45: #{tpu_custom_call.1} parent=43 // pred_check
          %p249 = pneg %p44
        $region46: #{tpu_custom_call.1} parent=43 // pred_check_branch
          %251 = sbr.rel (%p249) target = $region48
        $region47: #{tpu_custom_call.1} parent=43 // pred_region
          %252 = dma.done %s245, 384
        $region48: #{tpu_custom_call.1} parent=43 // pred_fallthru
          _
        %s253 = sand.u32 %s31, 1
        %s254 = scalar_lea.sflag [#allocation3], %s253
        %s255 = sand.u32 %s31, 1
        %s256 = smul.addr %s255, 24
        %s257 = scalar_lea.vmem [#allocation2], %s256
        %p258 = pneg %p44
        %p259 = pneg %p41
        %p260 = pneg %p65
        %p261 = pneg %p62
        %p262 = pneg %p86
        %p263 = pneg %p83
        %p264 = pneg %p107
        %p265 = pneg %p104
        %p266 = pneg %p128
        %p267 = pneg %p125
        %p268 = scmp.lt.s32.totalorder %s23, 1
        %s269 = scalar_select %p268, %s23, 1
        %s270 = scalar_lea.vmem %s5, %s269
        %p271 = pneg %p154
        %p272 = pneg %p151
        %p273 = pneg %p180
        %p274 = pneg %p177
        %s275 = sand.u32 %s167, 1
        %s276 = scalar_lea.sflag [#allocation4], %s275
        %s277 = sand.u32 %s167, 1
        %s278 = smul.addr %s277, 8
        %s279 = scalar_lea.vmem [#allocation5], %s278
        %p280 = scmp.lt.s32.totalorder %s23, 1
        %s281 = scalar_select %p280, %s23, 1
        %s282 = scalar_lea.vmem %s5, %s281
        %v283 = vld [vmem:[%s248] sm:$0xff]
        %v284 = vld [vmem:[%s248 + $0x8] sm:$0xff]
        %v285 = vld [vmem:[%s248 + $0x10] sm:$0xff]
        %v286 = vld [vmem:[%s1] sm:$0xff]
        %v287 = vld [vmem:[%s3] sm:$0xff]
        %289 = vset.pattern.permute.xlu0 0
        %290 = vperm.xlu0 %289, %v287
        %v291 = vpop.permute.xlu0 %290
        %vm293 = vcmask 195584
        %v295 = vsel %vm293, %v286, 0
        %297 = vmatprep.subr.mxu0 0.0
        %298 = vmatpush1.msra.mxu0 0.0
        %299 = vmatprep.subr.mxu0 0.0
        %300 = vmatpush1.msra.mxu0 0.0
        %301 = vmatprep.subr.mxu0 0.0
        %302 = vmatpush1.msra.mxu0 0.0
        %303 = vmatprep.subr.mxu0 0.0
        %304 = vmatpush1.msra.mxu0 0.0
        %305 = vmatprep.subr.mxu0 0.0
        %306 = vmatpush1.msra.mxu0 0.0
        %307 = vmatprep.subr.mxu0 0.0
        %308 = vmatpush1.msra.mxu0 0.0
        %309 = vmatprep.subr.mxu0 0.0
        %310 = vmatpush1.msra.mxu0 0.0
        %311 = vmatprep.subr.mxu0 0.0
        %312 = vmatpush1.msra.mxu0 0.0
        %313 = vmatprep.subr.mxu0 0.0
        %314 = vmatpush1.msra.mxu0 0.0
        %315 = vmatprep.subr.mxu0 0.0
        %316 = vmatpush1.msra.mxu0 0.0
        %317 = vmatprep.subr.mxu0 0.0
        %318 = vmatpush1.msra.mxu0 0.0
        %319 = vmatprep.subr.mxu0 0.0
        %320 = vmatpush1.msra.mxu0 0.0
        %321 = vmatprep.subr.mxu0 0.0
        %322 = vmatpush1.msra.mxu0 0.0
        %323 = vmatprep.subr.mxu0 0.0
        %324 = vmatpush1.msra.mxu0 %v285
        %325 = vmatprep.subr.mxu0 0.0
        %326 = vmatpush1.msra.mxu0 %v284
        %327 = vmatprep.subr.mxu0 0.0
        %328 = vmatpush1.msra.mxu0 %v283
        %329 = vmatprep.subr.mxu0 0.0
        %330 = vmatpush2.msra.mxu0 0.0
        %331 = vmatprep.subr.mxu0 0.0
        %332 = vmatpush2.msra.mxu0 0.0
        %333 = vmatprep.subr.mxu0 0.0
        %334 = vmatpush2.msra.mxu0 0.0
        %335 = vmatprep.subr.mxu0 0.0
        %336 = vmatpush2.msra.mxu0 0.0
        %337 = vmatprep.subr.mxu0 0.0
        %338 = vmatpush2.msra.mxu0 0.0
        %339 = vmatprep.subr.mxu0 0.0
        %340 = vmatpush2.msra.mxu0 0.0
        %341 = vmatprep.subr.mxu0 0.0
        %342 = vmatpush2.msra.mxu0 0.0
        %343 = vmatprep.subr.mxu0 0.0
        %344 = vmatpush2.msra.mxu0 0.0
        %345 = vmatprep.subr.mxu0 0.0
        %346 = vmatpush2.msra.mxu0 0.0
        %347 = vmatprep.subr.mxu0 0.0
        %348 = vmatpush2.msra.mxu0 0.0
        %349 = vmatprep.subr.mxu0 0.0
        %350 = vmatpush2.msra.mxu0 0.0
        %351 = vmatprep.subr.mxu0 0.0
        %352 = vmatpush2.msra.mxu0 0.0
        %353 = vmatprep.subr.mxu0 0.0
        %354 = vmatpush2.msra.mxu0 0.0
        %355 = vmatprep.subr.mxu0 0.0
        %356 = vmatpush2.msra.mxu0 0.0
        %357 = vmatprep.subr.mxu0 0.0
        %358 = vmatpush2.msra.mxu0 0.0
        %359 = vmatprep.subr.mxu0 0.0
        %360 = vmatpush2.msra.mxu0 0.0
        %361 = vmatprep.mubr.f32.mxu0 0.0
        %362 = vmatmul.mubr.f32.gmra.mxu0 %v295
        %v363 = vpop.f32.mrf.mxu0
        %v364 = vadd.f32 %v291, %v363
        %v365 = vpop.f32.mrf.mxu0
        %366 = vdwg.mxu0
        %v367 = vmax.f32 %v364, 0.0
        %v368 = vld [vmem:[%s282] sm:$0x1]
        %v370 = vlaneseq
        %v371 = vshrl.u32 %v370, 7
        %v372 = vsub.s32 0, %v371
        %v373 = vrot.slane %v368, %v372
        %v375 = vmul.f32 %v367, %v373
        %376 = vrot.lane.b32.xlu0 %v375, 1
        %v377 = vpop.permute.xlu0 %376
        %378 = vrot.lane.b32.xlu0 %v375, 127
        %v379 = vpop.permute.xlu0 %378
        %v380 = vld [vmem:[%s2] sm:$0xff]
        %v381 = vld [vmem:[%s4] sm:$0xff]
        %383 = vset.pattern.permute.xlu0 0
        %384 = vperm.xlu0 %383, %v381
        %v385 = vpop.permute.xlu0 %384
        %v388 = vsel %vm293, %v380, 0
        %390 = vmatprep.subr.mxu0 0.0
        %391 = vmatpush1.msra.mxu0 0.0
        %392 = vmatprep.subr.mxu0 0.0
        %393 = vmatpush1.msra.mxu0 0.0
        %394 = vmatprep.subr.mxu0 0.0
        %395 = vmatpush1.msra.mxu0 0.0
        %396 = vmatprep.subr.mxu0 0.0
        %397 = vmatpush1.msra.mxu0 0.0
        %398 = vmatprep.subr.mxu0 0.0
        %399 = vmatpush1.msra.mxu0 0.0
        %400 = vmatprep.subr.mxu0 0.0
        %401 = vmatpush1.msra.mxu0 0.0
        %402 = vmatprep.subr.mxu0 0.0
        %403 = vmatpush1.msra.mxu0 0.0
        %404 = vmatprep.subr.mxu0 0.0
        %405 = vmatpush1.msra.mxu0 0.0
        %406 = vmatprep.subr.mxu0 0.0
        %407 = vmatpush1.msra.mxu0 0.0
        %408 = vmatprep.subr.mxu0 0.0
        %409 = vmatpush1.msra.mxu0 0.0
        %410 = vmatprep.subr.mxu0 0.0
        %411 = vmatpush1.msra.mxu0 0.0
        %412 = vmatprep.subr.mxu0 0.0
        %413 = vmatpush1.msra.mxu0 0.0
        %414 = vmatprep.subr.mxu0 0.0
        %415 = vmatpush1.msra.mxu0 0.0
        %416 = vmatprep.subr.mxu0 0.0
        %417 = vmatpush1.msra.mxu0 %v379
        %418 = vmatprep.subr.mxu0 0.0
        %419 = vmatpush1.msra.mxu0 %v375
        %420 = vmatprep.subr.mxu0 0.0
        %421 = vmatpush1.msra.mxu0 %v377
        %422 = vmatprep.subr.mxu0 0.0
        %423 = vmatpush2.msra.mxu0 0.0
        %424 = vmatprep.subr.mxu0 0.0
        %425 = vmatpush2.msra.mxu0 0.0
        %426 = vmatprep.subr.mxu0 0.0
        %427 = vmatpush2.msra.mxu0 0.0
        %428 = vmatprep.subr.mxu0 0.0
        %429 = vmatpush2.msra.mxu0 0.0
        %430 = vmatprep.subr.mxu0 0.0
        %431 = vmatpush2.msra.mxu0 0.0
        %432 = vmatprep.subr.mxu0 0.0
        %433 = vmatpush2.msra.mxu0 0.0
        %434 = vmatprep.subr.mxu0 0.0
        %435 = vmatpush2.msra.mxu0 0.0
        %436 = vmatprep.subr.mxu0 0.0
        %437 = vmatpush2.msra.mxu0 0.0
        %438 = vmatprep.subr.mxu0 0.0
        %439 = vmatpush2.msra.mxu0 0.0
        %440 = vmatprep.subr.mxu0 0.0
        %441 = vmatpush2.msra.mxu0 0.0
        %442 = vmatprep.subr.mxu0 0.0
        %443 = vmatpush2.msra.mxu0 0.0
        %444 = vmatprep.subr.mxu0 0.0
        %445 = vmatpush2.msra.mxu0 0.0
        %446 = vmatprep.subr.mxu0 0.0
        %447 = vmatpush2.msra.mxu0 0.0
        %448 = vmatprep.subr.mxu0 0.0
        %449 = vmatpush2.msra.mxu0 0.0
        %450 = vmatprep.subr.mxu0 0.0
        %451 = vmatpush2.msra.mxu0 0.0
        %452 = vmatprep.subr.mxu0 0.0
        %453 = vmatpush2.msra.mxu0 0.0
        %454 = vmatprep.mubr.f32.mxu0 0.0
        %455 = vmatmul.mubr.f32.gmra.mxu0 %v388
        %v456 = vpop.f32.mrf.mxu0
        %v457 = vadd.f32 %v385, %v456
        %v458 = vpop.f32.mrf.mxu0
        %459 = vdwg.mxu0
        %v460 = vadd.f32 %v457, %v284
        %v461 = vmax.f32 %v460, 0.0
        %462 = vst [vmem:[%s279] sm:$0xff] %v461
        %s463 = sand.u32 %s167, 1
        %s464 = scalar_lea.sflag [#allocation4], %s463
        %s465 = sand.u32 %s167, 1
        %s466 = smul.addr %s465, 8
        %s467 = scalar_lea.vmem [#allocation5], %s466
        // Predicated region
        $region49: #{tpu_custom_call.1} parent=43 // pred_check
          %p468 = pneg %p177
        $region50: #{tpu_custom_call.1} parent=43 // pred_check_branch
          %470 = sbr.rel (%p468) target = $region52
        $region51: #{tpu_custom_call.1} parent=43 // pred_region
          %s472 = ssub.s32 128, 128
          %473 = vsyncadd %s464, %s472
          %s474 = smul.addr %s23, 128
          %s475 = scalar_lea.hbm %s6, %s474
          %s477 = sshll.u32 %s467, 4
          %s478 = int_to_ptr.vmem [resolvable:$true] %s477
          %480 = dma.vmem_to_hbm [thread:$0]  %s478, 128, %s475, %s464
        $region52: #{tpu_custom_call.1} parent=43 // pred_fallthru
          _
      $region44: #{tpu_custom_call.1} parent=5 // pred_fallthru
        _
      %p481 = scmp.le.s32.totalorder 2, %s18
      // Predicated region
      $region53: #{tpu_custom_call.1} parent=5 // pred_check
        %p482 = pneg %p481
      $region54: #{tpu_custom_call.1} parent=5 // pred_check_branch
        %484 = sbr.rel (%p482) target = $region56
      $region55: #{tpu_custom_call.1} parent=5 // pred_region
        %s485 = ssub.s32 %s18, 2
        // Predicated region
        $region57: #{tpu_custom_call.1} parent=55 // pred_check
          %p486 = pneg %p183
        $region58: #{tpu_custom_call.1} parent=55 // pred_check_branch
          %488 = sbr.rel (%p486) target = $region60
        $region59: #{tpu_custom_call.1} parent=55 // pred_region
          %s489 = sand.u32 %s168, 1
          %s490 = scalar_lea.sflag [#allocation4], %s489
          %s491 = sand.u32 %s168, 1
          %s492 = smul.addr %s491, 8
          %s493 = scalar_lea.vmem [#allocation5], %s492
          %494 = dma.done %s490, 128
        $region60: #{tpu_custom_call.1} parent=55 // pred_fallthru
          _
      $region56: #{tpu_custom_call.1} parent=5 // pred_fallthru
        _
    $region6: #{tpu_custom_call.1} parent=1 // loop_footer
      %s22 = sadd.s32 1, %s18
    $region7: #{tpu_custom_call.1} parent=1 // loop_footer_branch
      %17 = sbr.rel target = $region3
    $region8: #{tpu_custom_call.1} parent=1 // loop_exit
      _
    %495 = vsyncpa [#allocation3], 1
    %s496 = scalar_lea.sflag [#allocation3], 1
    %497 = vsyncpa %s496, 1
    %498 = vsyncpa [#allocation4], 1
    %s499 = scalar_lea.sflag [#allocation4], 1
    %500 = vsyncpa %s499, 1

</llo_original>
